<compile_context>
chip_gen: v7x
topology: tpu7x:2x2x1
jax: 0.10.0
libtpu: 0.0.40
codegen_flags: <defaults>
</compile_context>

<pallas_src>
import functools

import jax
import jax.numpy as jnp
from jax import lax
from jax.experimental import pallas as pl
from jax.experimental.pallas import tpu as pltpu

# Tap order t = (dh+1)*3 + (dw+1): matches an HWIO weight transposed to (Cout, kh, kw, Cin) and
# reshaped to (Cout, 9*Cin).
_TAPS = tuple((dh, dw) for dh in (-1, 0, 1) for dw in (-1, 0, 1))

_ROLL_IS_NUMPY = None


def _roll_is_numpy_convention():
    """One-time device probe: does pltpu.roll follow np.roll's shift direction?

    The kernel only needs "out[:, p] = x[:, p + s]"; the probe lets us pick the correct sign for
    the rotate amount regardless of the installed JAX version's convention.
    """
    global _ROLL_IS_NUMPY
    if _ROLL_IS_NUMPY is None:
        def probe(x_ref, o_ref):
            o_ref[...] = pltpu.roll(x_ref[...], shift=1, axis=1)

        x = jnp.broadcast_to(jnp.arange(128, dtype=jnp.int32), (8, 128))
        out = pl.pallas_call(probe, out_shape=jax.ShapeDtypeStruct((8, 128), jnp.int32))(x)
        _ROLL_IS_NUMPY = bool(int(out[0, 0]) == 127)   # np.roll: element 127 wraps to index 0
    return _ROLL_IS_NUMPY


def _make_fused_kernel(H, W, cin_pad, nf, n_blocks, compute_dtype, roll_is_numpy):
    """Fused conv_in + n_blocks residual blocks over one batch sample, channels-first (C, H*W)."""
    HW = H * W

    def shift_lanes(x, s):
        # out[:, p] = x[:, (p + s) % HW]; wrapped entries are zeroed by the tap mask afterwards.
        if s == 0:
            return x
        amt = (-s) % HW if roll_is_numpy else s % HW
        return pltpu.roll(x, shift=amt, axis=1)

    def kernel(x_ref, w_in_ref, b_in_ref, w_blk_ref, b_blk_ref, mask_ref, out_ref,
               patch_ref, h_ref):
        def conv(x_cm, c, w, b):
            # x_cm: (c, HW) activation in compute_dtype; w: (nf, 9c) compute_dtype; b: (nf, 1) f32.
            # Build the im2col patch as 9 sublane-aligned slabs (roll + border mask), then one
            # MXU matmul with HW=256 on the lane/output dimension.
            for t, (dh, dw) in enumerate(_TAPS):
                v = shift_lanes(x_cm, dh * W + dw)
                if (dh, dw) != (0, 0):
                    v = v * mask_ref[t:t + 1, :]            # zero out-of-image taps
                patch_ref[t * c:(t + 1) * c, :] = v
            return jnp.dot(w, patch_ref[0:9 * c, :],
                           preferred_element_type=jnp.float32) + b

        # ---- conv_in ----
        h_ref[...] = conv(x_ref[0].astype(compute_dtype), cin_pad,
                          w_in_ref[...], b_in_ref[...])

        # ---- residual blocks: h (identity) stays f32 in VMEM, matmul inputs in compute_dtype ----
        def body(i, carry):
            t1 = conv(h_ref[...].astype(compute_dtype), nf,
                      w_blk_ref[2 * i], b_blk_ref[2 * i])
            t1 = jnp.where(t1 >= 0.0, t1, 0.2 * t1)          # LeakyReLU(negative_slope=0.2)
            t2 = conv(t1.astype(compute_dtype), nf,
                      w_blk_ref[2 * i + 1], b_blk_ref[2 * i + 1])
            h_ref[...] = h_ref[...] + t2
            return carry

        lax.fori_loop(0, n_blocks, body, 0)

        out_ref[0] = h_ref[...].astype(out_ref.dtype)        # (nf, HW): unmasked lane-dense store

    return kernel


def _weights_as_mat(w_hwio, cin_pad=None):
    """HWIO (3,3,Ci,Co) -> (Co, 9*Ci) with column order (kh, kw, ci), matching the patch layout."""
    kh, kw, ci, co = w_hwio.shape
    if cin_pad is not None and cin_pad != ci:
        w_hwio = jnp.pad(w_hwio, ((0, 0), (0, 0), (0, cin_pad - ci), (0, 0)))
        ci = cin_pad
    return jnp.transpose(w_hwio, (3, 0, 1, 2)).reshape(co, 9 * ci)


def _forward(params, x_nchw, compute_dtype):
    N, Cin, H, W = x_nchw.shape
    HW = H * W
    nf = params["conv_in_w"].shape[-1]
    n_blocks = len(params["blocks"])

    # Pad input channels up to the sublane granule of the compute dtype so every patch-slab store
    # is sublane-aligned (the padded channels and weight columns are zero).
    granule = 16 if jnp.dtype(compute_dtype).itemsize == 2 else 8
    cin_pad = -(-Cin // granule) * granule

    x = x_nchw.reshape(N, Cin, HW)                                       # free reshape (NCHW)
    if cin_pad != Cin:
        x = jnp.pad(x, ((0, 0), (0, cin_pad - Cin), (0, 0)))

    # Weight prep (layout plumbing, done once in the wrapper).
    w_in = _weights_as_mat(params["conv_in_w"], cin_pad).astype(compute_dtype)   # (nf, 9*cin_pad)
    b_in = params["conv_in_b"].reshape(nf, 1).astype(jnp.float32)                # (nf, 1)
    w_blk = jnp.stack(
        [_weights_as_mat(w) for blk in params["blocks"] for w in (blk[0], blk[2])]
    ).astype(compute_dtype)                                                      # (2B, nf, 9*nf)
    b_blk = jnp.stack(
        [b.reshape(nf, 1) for blk in params["blocks"] for b in (blk[1], blk[3])]
    ).astype(jnp.float32)                                                        # (2B, nf, 1)

    # Static 0/1 border masks, one (HW,) row per tap (computed outside the kernel).
    row = jnp.arange(HW, dtype=jnp.int32) // W
    col = jnp.arange(HW, dtype=jnp.int32) % W
    masks = jnp.stack(
        [((row + dh >= 0) & (row + dh < H) & (col + dw >= 0) & (col + dw < W))
         for dh, dw in _TAPS]
    ).astype(compute_dtype)                                                      # (9, HW)

    kernel = _make_fused_kernel(H, W, cin_pad, nf, n_blocks, compute_dtype,
                                _roll_is_numpy_convention())

    out = pl.pallas_call(
        kernel,
        out_shape=jax.ShapeDtypeStruct((N, nf, HW), jnp.float32),
        grid=(N,),
        in_specs=[
            pl.BlockSpec((1, cin_pad, HW), lambda n: (n, 0, 0)),
            pl.BlockSpec((nf, 9 * cin_pad), lambda n: (0, 0)),
            pl.BlockSpec((nf, 1), lambda n: (0, 0)),
            pl.BlockSpec((2 * n_blocks, nf, 9 * nf), lambda n: (0, 0, 0)),
            pl.BlockSpec((2 * n_blocks, nf, 1), lambda n: (0, 0, 0)),
            pl.BlockSpec((9, HW), lambda n: (0, 0)),
        ],
        out_specs=pl.BlockSpec((1, nf, HW), lambda n: (n, 0, 0)),
        scratch_shapes=[
            pltpu.VMEM((9 * nf, HW), compute_dtype),   # im2col patch (sublane-concatenated taps)
            pltpu.VMEM((nf, HW), jnp.float32),         # residual carrier h (f32)
        ],
        compiler_params=pltpu.CompilerParams(
            dimension_semantics=("parallel",),         # batch split across v7x's two TensorCores
        ),
    )(x, w_in, b_in, w_blk, b_blk, masks)

    return out.reshape(N, nf, H, W)                    # NCHW directly: no transpose needed


def predictive_module_mimo(params, x_nchw, compute_dtype=jnp.bfloat16):
    """Forward pass matching PredictiveModuleMIMO: NCHW in -> NCHW out."""
    return _forward(params, x_nchw, compute_dtype)


def init_params(key, channel_in, nf, block_num_rbm):
    """Deterministic synthetic init mirroring the module's parameter shapes (HWIO weights)."""
    keys = jax.random.split(key, 2 + 4 * block_num_rbm)
    conv_in_w = jax.random.normal(keys[0], (3, 3, channel_in, nf), jnp.float32)
    conv_in_w = conv_in_w * (1.0 / jnp.sqrt(9.0 * channel_in))        # ~ default conv init scale
    conv_in_b = 0.01 * jax.random.normal(keys[1], (nf,), jnp.float32)

    xavier_std = jnp.sqrt(2.0 / (9.0 * nf + 9.0 * nf)) * 0.1          # xavier_normal * 0.1
    blocks = []
    for i in range(block_num_rbm):
        kw1, kb1, kw2, kb2 = keys[2 + 4 * i: 6 + 4 * i]
        w1 = xavier_std * jax.random.normal(kw1, (3, 3, nf, nf), jnp.float32)
        b1 = 0.01 * jax.random.normal(kb1, (nf,), jnp.float32)
        w2 = xavier_std * jax.random.normal(kw2, (3, 3, nf, nf), jnp.float32)
        b2 = 0.01 * jax.random.normal(kb2, (nf,), jnp.float32)
        blocks.append((w1, b1, w2, b2))
    return {"conv_in_w": conv_in_w, "conv_in_b": conv_in_b, "blocks": blocks}


# ------------------------- pure-JAX reference (for verification) -------------------------
def _ref_forward_nchw(params, x_nchw, compute_dtype=jnp.float32):
    """Reference with the same cast points as the kernel (conv inputs in compute_dtype, f32 acc)."""
    x = jnp.transpose(x_nchw, (0, 2, 3, 1))

    def conv(h, w, b):
        y = jax.lax.conv_general_dilated(
            h.astype(compute_dtype), w.astype(compute_dtype),
            window_strides=(1, 1), padding="SAME",
            dimension_numbers=("NHWC", "HWIO", "NHWC"),
            preferred_element_type=jnp.float32,
            precision=jax.lax.Precision.HIGHEST)
        return y + b.reshape(1, 1, 1, -1).astype(jnp.float32)

    h = conv(x, params["conv_in_w"], params["conv_in_b"])
    for (w1, b1, w2, b2) in params["blocks"]:
        t = conv(h, w1, b1)
        t = jnp.where(t >= 0.0, t, 0.2 * t)
        h = h + conv(t, w2, b2)
    return jnp.transpose(h, (0, 3, 1, 2))


if __name__ == "__main__":
    # Shapes consistent with the module: channel_in=4, nf=32, 8 residual blocks, 2x16x16 frames.
    N, H, W = 2, 16, 16
    channel_in, nf, block_num_rbm = 4, 32, 8

    key = jax.random.PRNGKey(0)
    kx, kp = jax.random.split(key)
    x = jax.random.normal(kx, (N, channel_in, H, W), jnp.float32)   # NCHW, like the PyTorch module
    params = init_params(kp, channel_in, nf, block_num_rbm)

    _roll_is_numpy_convention()   # one-time device probe, done outside any jit trace

    # Performance path: bf16 matmul inputs, f32 bias / LeakyReLU / residual.
    fwd_bf16 = jax.jit(functools.partial(predictive_module_mimo, compute_dtype=jnp.bfloat16))
    out_bf16 = jax.block_until_ready(fwd_bf16(params, x))

    # Full-f32 path: tight check of the roll/mask/patch/weight-indexing logic.
    fwd_f32 = jax.jit(functools.partial(predictive_module_mimo, compute_dtype=jnp.float32))
    out_f32 = jax.block_until_ready(fwd_f32(params, x))

    ref_f32 = _ref_forward_nchw(params, x, jnp.float32)
    ref_bf16 = _ref_forward_nchw(params, x, jnp.bfloat16)

    assert out_f32.shape == (N, nf, H, W) and out_bf16.shape == (N, nf, H, W)
    assert bool(jnp.all(jnp.isfinite(out_f32))) and bool(jnp.all(jnp.isfinite(out_bf16)))
    assert bool(jnp.allclose(out_f32, ref_f32, atol=1e-3, rtol=1e-3)), "f32 mismatch vs reference"
    assert bool(jnp.allclose(out_bf16, ref_bf16, atol=1e-2, rtol=1e-2)), "bf16 mismatch vs reference"

    print("KERNEL_OK")
</pallas_src>

<mosaic_0001>
module attributes {stable_mosaic.version = 11 : i64} {
  func.func @probe(%arg0: memref<8x128xi32, #tpu.memory_space<vmem>>, %arg1: memref<8x128xi32, #tpu.memory_space<vmem>>) attributes {dimension_semantics = [], scalar_prefetch = 0 : i64, scratch_operands = 0 : i64, tpu.core_type = #tpu.core_type<tc>} {
    %c0 = arith.constant 0 : index
    %c0_0 = arith.constant 0 : index
    %0 = vector.load %arg0[%c0, %c0_0] : memref<8x128xi32, #tpu.memory_space<vmem>>, vector<8x128xi32>
    %c1_i32 = arith.constant 1 : i32
    %1 = tpu.dynamic_rotate %0 by %c1_i32 dim 1 : vector<8x128xi32>, i32 -> vector<8x128xi32>
    %c0_1 = arith.constant 0 : index
    %c0_2 = arith.constant 0 : index
    %2 = vector.load %arg1[%c0_1, %c0_2] : memref<8x128xi32, #tpu.memory_space<vmem>>, vector<8x128xi32>
    tpu.vector_store %arg1[%c0_1, %c0_2], %1 {strides = array<i32>} : memref<8x128xi32, #tpu.memory_space<vmem>>, vector<8x128xi32>,
    return
  }
}

</mosaic_0001>

<llo_original>
// kernel: tpu_custom_call.1
$region0: #{tpu_custom_call.1}
  #allocation0 [shape = 'u32[]', space=smem, size = 0x4, offset = 0x4, fixed_abs, tag = 'smem constant byte address 0x4 - core index']
  #allocation1 [shape = 'u32[144,128]{1,0:T(1,128)}', space=vmem, size = 0x12000, scoped, tag = 'internal scratch']
  %s0 = inlined_call_operand.hbm [shape: s32[8,128], index: 0, kind: input, shape index: {}]
  %s1 = inlined_call_operand.hbm [shape: s32[8,128], index: 1, kind: output, shape index: {}]
  %s2 = sld [smem:[#allocation0]]
  $region18: #{tpu_custom_call.1} parent=0
    _
  %s4 = ssub.s32 1, %s2
  %s5 = scalar_select 0, %s4, %s2
  $region1: #{tpu_custom_call.1} parent=0
    #allocation2 [shape = 'u8[4096]{0}', space=vmem, size = 0x1000, scoped, tag = 'input window, operand 0, single buffered']
    #allocation3 [shape = 's32[1]{0}', space=sflag, size = 0x4, scoped, tag = 'scoped memory for tpu_custom_call.1']
    #allocation4 [shape = 's32[1]{0}', space=sflag, size = 0x4, scoped, tag = 'scoped memory for tpu_custom_call.1']
    #allocation5 [shape = 'u8[4096]{0}', space=vmem, size = 0x1000, scoped, tag = 'output window, operand 0, single buffered']
    %6 = vsyncpa [#allocation3], 0
    %7 = vsyncpa [#allocation4], 0
    // Predicated region
    $region2: #{tpu_custom_call.1} parent=1 // pred_check
      _
    $region3: #{tpu_custom_call.1} parent=1 // pred_check_branch
      %9 = sbr.rel (0) target = $region5
    $region4: #{tpu_custom_call.1} parent=1 // pred_region
      %s11 = ssub.s32 128, 128
      %12 = vsyncadd [#allocation3], %s11
      %s14 = sshll.u32 [#allocation2], 4
      %s15 = int_to_ptr.vmem [resolvable:$true] %s14
      %17 = dma.hbm_to_vmem [thread:$0]  %s0, 128, %s15, [#allocation3]
    $region5: #{tpu_custom_call.1} parent=1 // pred_fallthru
      _
    // Predicated region
    $region6: #{tpu_custom_call.1} parent=1 // pred_check
      _
    $region7: #{tpu_custom_call.1} parent=1 // pred_check_branch
      %19 = sbr.rel (0) target = $region9
    $region8: #{tpu_custom_call.1} parent=1 // pred_region
      %20 = dma.done [#allocation3], 128
    $region9: #{tpu_custom_call.1} parent=1 // pred_fallthru
      _
    %v21 = vld [vmem:[#allocation2] sm:$0xff]
    %22 = vrot.lane.b32.xlu0 %v21, 1
    %v23 = vpop.permute.xlu0 %22
    %24 = vst [vmem:[#allocation5] sm:$0xff] %v23
    // Predicated region
    $region10: #{tpu_custom_call.1} parent=1 // pred_check
      _
    $region11: #{tpu_custom_call.1} parent=1 // pred_check_branch
      %26 = sbr.rel (0) target = $region13
    $region12: #{tpu_custom_call.1} parent=1 // pred_region
      %s28 = ssub.s32 128, 128
      %29 = vsyncadd [#allocation4], %s28
      %s31 = sshll.u32 [#allocation5], 4
      %s32 = int_to_ptr.vmem [resolvable:$true] %s31
      %34 = dma.vmem_to_hbm [thread:$0]  %s32, 128, %s1, [#allocation4]
    $region13: #{tpu_custom_call.1} parent=1 // pred_fallthru
      _
    // Predicated region
    $region14: #{tpu_custom_call.1} parent=1 // pred_check
      _
    $region15: #{tpu_custom_call.1} parent=1 // pred_check_branch
      %36 = sbr.rel (0) target = $region17
    $region16: #{tpu_custom_call.1} parent=1 // pred_region
      %37 = dma.done [#allocation4], 128
    $region17: #{tpu_custom_call.1} parent=1 // pred_fallthru
      _
    %38 = vsyncpa [#allocation3], 1
    %39 = vsyncpa [#allocation4], 1

</llo_original>
